<compile_context>
chip_gen: v7x
topology: tpu7x:2x2x1
jax: 0.10.0
libtpu: 0.0.40
codegen_flags: <defaults>
</compile_context>

<pallas_src>
import functools

import jax
import jax.numpy as jnp
from jax.experimental import pallas as pl
from jax.experimental.pallas import tpu as pltpu


def _round_up(v, m):
    return ((v + m - 1) // m) * m


# --------------------------------------------------------------------------- #
# Kernel
# --------------------------------------------------------------------------- #
def _context_fused_kernel(x_ref, w_ref, b_ref, pos_ref, neg_ref):
    # x_ref:   (TM, D)       current batch tile
    # w_ref:   (D, 2*Hp)     fused [w_pos | w_neg] (zero-padded), VMEM-resident
    # b_ref:   (1, 2*Hp)     fused bias (zero-padded), VMEM-resident
    # pos_ref: (TM, Hp)      positive-branch output tile
    # neg_ref: (TM, Hp)      negative-branch output tile
    hp = pos_ref.shape[-1]

    z = jnp.dot(x_ref[...], w_ref[...], preferred_element_type=jnp.float32)
    z = z + b_ref[...].astype(jnp.float32)                    # (TM, 2Hp)+(1, 2Hp)

    # SiLU = z * sigmoid(z);  sigmoid(z) == 0.5 * (tanh(z/2) + 1)  (exact),
    # keeps the transcendental on the EUP instead of a precise f32 divide.
    silu = z * (0.5 * jnp.tanh(0.5 * z) + 0.5)
    silu = silu.astype(pos_ref.dtype)

    # Hp is a multiple of 128 -> vreg-aligned split, unmasked lane-dense stores.
    pos_ref[...] = silu[:, :hp]
    neg_ref[...] = silu[:, hp:]


# --------------------------------------------------------------------------- #
# One-time parameter fusion (call at setup time, NOT per forward)
# --------------------------------------------------------------------------- #
def prepare_context_params(w_pos, b_pos, w_neg, b_neg):
    """Fuse + lane-pad the two branches once.

    w_*: (D, H) (transposed vs torch's (H, D)),  b_*: (H,)
    Returns (w_cat, b_cat): (D, 2*Hp), (1, 2*Hp) with Hp = round_up(H, 128).
    """
    D, H = w_pos.shape
    hp = _round_up(H, 128)

    def padw(w):
        return jnp.pad(w, ((0, 0), (0, hp - H))) if hp != H else w

    def padb(b):
        return jnp.pad(b, ((0, hp - H),)) if hp != H else b

    w_cat = jnp.concatenate([padw(w_pos), padw(w_neg)], axis=1)          # (D, 2Hp)
    b_cat = jnp.concatenate([padb(b_pos), padb(b_neg)], axis=0)          # (2Hp,)
    return w_cat, b_cat.reshape(1, 2 * hp)


# --------------------------------------------------------------------------- #
# Forward wrapper
# --------------------------------------------------------------------------- #
@functools.partial(jax.jit, static_argnames=("hidden_dim", "tile_m"))
def context_network(x, w_cat, b_cat, *, hidden_dim, tile_m=512):
    """Pallas equivalent of Context_newtork.forward.

    x:      (..., D)
    w_cat:  (D, 2*Hp)  from prepare_context_params (built once)
    b_cat:  (1, 2*Hp)
    Returns (context_pos, context_neg), each (..., hidden_dim), dtype of x.
    """
    D = x.shape[-1]
    H = hidden_dim
    lead_shape = x.shape[:-1]

    n_pad = w_cat.shape[1]
    hp = n_pad // 2

    x2 = x.reshape(-1, D)
    B = x2.shape[0]

    # Sublane packing for the input dtype: f32 -> 8, bf16 -> 16, int8/fp8 -> 32.
    itemsize = x.dtype.itemsize
    sub = max(8, 32 // itemsize)

    # ---- balanced batch tiling ---------------------------------------------
    num_tiles = pl.cdiv(B, tile_m)
    if B >= 2 * sub:
        num_tiles = max(num_tiles, 2)          # give both v7x TCs work
    tm = _round_up(pl.cdiv(B, num_tiles), sub)

    # ---- VMEM budget: shrink tm if resident weights + pipelined tiles blow it
    w_bytes = D * n_pad * w_cat.dtype.itemsize + n_pad * b_cat.dtype.itemsize

    def _tile_bytes(t):
        # x tile (x2 double-buffered) + two output tiles (double-buffered)
        return 2 * t * D * itemsize + 2 * 2 * t * hp * itemsize

    vmem_budget = 48 * 1024 * 1024             # safe on v7x's 64 MiB / core
    while tm > sub and w_bytes + _tile_bytes(tm) > vmem_budget:
        tm = _round_up(tm // 2, sub)
    # TODO(synk): if w_bytes alone exceeds the budget (very large D * 2H), add a
    # second grid axis streaming weight columns instead of keeping them resident.

    b_padded = _round_up(B, tm)
    if b_padded != B:
        x2 = jnp.pad(x2, ((0, b_padded - B), (0, 0)))
    grid_m = b_padded // tm

    need = w_bytes + _tile_bytes(tm)
    vmem_limit = int(min(100 * 1024 * 1024,
                         max(16 * 1024 * 1024, 2 * need + (2 << 20))))

    pos_pad, neg_pad = pl.pallas_call(
        _context_fused_kernel,
        out_shape=(
            jax.ShapeDtypeStruct((b_padded, hp), x.dtype),
            jax.ShapeDtypeStruct((b_padded, hp), x.dtype),
        ),
        grid_spec=pltpu.PrefetchScalarGridSpec(
            num_scalar_prefetch=0,
            grid=(grid_m,),
            in_specs=[
                # x tile marches over the batch; weights/bias stay resident
                # with a single VMEM copy (constant index_map + Buffered(1)).
                pl.BlockSpec((tm, D), lambda i: (i, 0)),
                pl.BlockSpec((D, n_pad), lambda i: (0, 0),
                             pipeline_mode=pl.Buffered(1)),
                pl.BlockSpec((1, n_pad), lambda i: (0, 0),
                             pipeline_mode=pl.Buffered(1)),
            ],
            out_specs=[
                pl.BlockSpec((tm, hp), lambda i: (i, 0)),
                pl.BlockSpec((tm, hp), lambda i: (i, 0)),
            ],
        ),
        compiler_params=pltpu.CompilerParams(
            dimension_semantics=("parallel",),   # megacore-shard the batch axis
            vmem_limit_bytes=vmem_limit,
        ),
    )(x2, w_cat, b_cat)

    # Identity slices when B % tm == 0 and H % 128 == 0 (no extra copies).
    ctx_pos = pos_pad[:B, :H].reshape(*lead_shape, H)
    ctx_neg = neg_pad[:B, :H].reshape(*lead_shape, H)
    return ctx_pos, ctx_neg


# --------------------------------------------------------------------------- #
# Helpers / self-test
# --------------------------------------------------------------------------- #
def _init_linear_params(key, in_dim, out_dim, dtype=jnp.float32):
    """nn.Linear-style init (uniform +/- 1/sqrt(in_dim)); weight stored (in, out)."""
    kw, kb = jax.random.split(key)
    bound = 1.0 / jnp.sqrt(in_dim)
    w = jax.random.uniform(kw, (in_dim, out_dim), dtype=dtype,
                           minval=-bound, maxval=bound)
    b = jax.random.uniform(kb, (out_dim,), dtype=dtype,
                           minval=-bound, maxval=bound)
    return w, b


if __name__ == "__main__":
    # Small shapes consistent with the module's forward: x (batch, input_dim)
    batch, input_dim, hidden_dim = 8, 32, 32

    key = jax.random.PRNGKey(0)
    kx, kpos, kneg = jax.random.split(key, 3)

    x = jax.random.normal(kx, (batch, input_dim), dtype=jnp.float32)
    w_pos, b_pos = _init_linear_params(kpos, input_dim, hidden_dim)
    w_neg, b_neg = _init_linear_params(kneg, input_dim, hidden_dim)

    # One-time parameter fusion/padding (hoisted out of the forward path).
    w_cat, b_cat = prepare_context_params(w_pos, b_pos, w_neg, b_neg)

    ctx_pos, ctx_neg = context_network(x, w_cat, b_cat, hidden_dim=hidden_dim)
    jax.block_until_ready((ctx_pos, ctx_neg))

    # Reference check in plain JAX.
    def silu(z):
        return z * jax.nn.sigmoid(z)

    ref_pos = silu(x @ w_pos + b_pos)
    ref_neg = silu(x @ w_neg + b_neg)
    assert ctx_pos.shape == (batch, hidden_dim)
    assert ctx_neg.shape == (batch, hidden_dim)
    assert jnp.allclose(ctx_pos, ref_pos, atol=1e-5, rtol=1e-5)
    assert jnp.allclose(ctx_neg, ref_neg, atol=1e-5, rtol=1e-5)

    print("KERNEL_OK")
</pallas_src>

<mosaic_0001>
module attributes {stable_mosaic.version = 11 : i64} {
  func.func @_context_fused_kernel(%arg0: i32, %arg1: memref<8x32xf32, #tpu.memory_space<vmem>>, %arg2: memref<32x256xf32, #tpu.memory_space<vmem>>, %arg3: memref<1x256xf32, #tpu.memory_space<vmem>>, %arg4: memref<8x128xf32, #tpu.memory_space<vmem>>, %arg5: memref<8x128xf32, #tpu.memory_space<vmem>>) attributes {dimension_semantics = [#tpu.dimension_semantics<parallel>], iteration_bounds = array<i64: 1>, scalar_prefetch = 0 : i64, scratch_operands = 0 : i64, tpu.core_type = #tpu.core_type<tc>, window_params = [{transform_indices = @transform_0, window_bounds = array<i64: 8, 32>}, {pipeline_mode = #tpu.pipeline_mode<synchronous>, transform_indices = @transform_1, window_bounds = array<i64: 32, 256>}, {pipeline_mode = #tpu.pipeline_mode<synchronous>, transform_indices = @transform_2, window_bounds = array<i64: 1, 256>}, {transform_indices = @transform_3, window_bounds = array<i64: 8, 128>}, {transform_indices = @transform_4, window_bounds = array<i64: 8, 128>}]} {
    %c0 = arith.constant 0 : index
    %c0_0 = arith.constant 0 : index
    %0 = vector.load %arg1[%c0, %c0_0] : memref<8x32xf32, #tpu.memory_space<vmem>>, vector<8x32xf32>
    %c0_1 = arith.constant 0 : index
    %c0_2 = arith.constant 0 : index
    %1 = vector.load %arg2[%c0_1, %c0_2] : memref<32x256xf32, #tpu.memory_space<vmem>>, vector<32x256xf32>
    %cst = arith.constant dense<0.000000e+00> : vector<8x256xf32>
    %2 = tpu.matmul %0, %1, %cst {dimension_numbers = #tpu.dot_dimension_numbers<[1], [0], [0], [1], [0, 0, 1, 1], [], []>} : vector<8x32xf32>, vector<32x256xf32>, vector<8x256xf32> -> vector<8x256xf32>
    %c0_3 = arith.constant 0 : index
    %c0_4 = arith.constant 0 : index
    %3 = vector.load %arg3[%c0_3, %c0_4] : memref<1x256xf32, #tpu.memory_space<vmem>>, vector<1x256xf32>
    %4 = vector.broadcast %3 : vector<1x256xf32> to vector<8x256xf32>
    %5 = arith.addf %2, %4 : vector<8x256xf32>
    %cst_5 = arith.constant 5.000000e-01 : f32
    %6 = vector.broadcast %cst_5 : f32 to vector<8x256xf32>
    %7 = arith.mulf %6, %5 : vector<8x256xf32>
    %8 = math.tanh %7 : vector<8x256xf32>
    %cst_6 = arith.constant 5.000000e-01 : f32
    %9 = vector.broadcast %cst_6 : f32 to vector<8x256xf32>
    %10 = arith.mulf %9, %8 : vector<8x256xf32>
    %cst_7 = arith.constant 5.000000e-01 : f32
    %11 = vector.broadcast %cst_7 : f32 to vector<8x256xf32>
    %12 = arith.addf %10, %11 : vector<8x256xf32>
    %13 = arith.mulf %5, %12 : vector<8x256xf32>
    %14 = vector.extract_strided_slice %13 {offsets = [0, 0], sizes = [8, 128], strides = [1, 1]} : vector<8x256xf32> to vector<8x128xf32>
    %c0_8 = arith.constant 0 : index
    %c0_9 = arith.constant 0 : index
    %15 = vector.load %arg4[%c0_8, %c0_9] : memref<8x128xf32, #tpu.memory_space<vmem>>, vector<8x128xf32>
    tpu.vector_store %arg4[%c0_8, %c0_9], %14 {strides = array<i32>} : memref<8x128xf32, #tpu.memory_space<vmem>>, vector<8x128xf32>,
    %16 = vector.extract_strided_slice %13 {offsets = [0, 128], sizes = [8, 128], strides = [1, 1]} : vector<8x256xf32> to vector<8x128xf32>
    %c0_10 = arith.constant 0 : index
    %c0_11 = arith.constant 0 : index
    %17 = vector.load %arg5[%c0_10, %c0_11] : memref<8x128xf32, #tpu.memory_space<vmem>>, vector<8x128xf32>
    tpu.vector_store %arg5[%c0_10, %c0_11], %16 {strides = array<i32>} : memref<8x128xf32, #tpu.memory_space<vmem>>, vector<8x128xf32>,
    return
  }
  func.func @transform_0(%arg0: i32) -> (i32, i32) {
    %c0_i32 = arith.constant 0 : i32
    %c0_i32_0 = arith.constant 0 : i32
    return %arg0, %c0_i32 : i32, i32
  }
  func.func @transform_1(%arg0: i32) -> (i32, i32) {
    %c0_i32 = arith.constant 0 : i32
    %c0_i32_0 = arith.constant 0 : i32
    %c0_i32_1 = arith.constant 0 : i32
    return %c0_i32, %c0_i32_0 : i32, i32
  }
  func.func @transform_2(%arg0: i32) -> (i32, i32) {
    %c0_i32 = arith.constant 0 : i32
    %c0_i32_0 = arith.constant 0 : i32
    %c0_i32_1 = arith.constant 0 : i32
    return %c0_i32, %c0_i32_0 : i32, i32
  }
  func.func @transform_3(%arg0: i32) -> (i32, i32) {
    %c0_i32 = arith.constant 0 : i32
    %c0_i32_0 = arith.constant 0 : i32
    return %arg0, %c0_i32 : i32, i32
  }
  func.func @transform_4(%arg0: i32) -> (i32, i32) {
    %c0_i32 = arith.constant 0 : i32
    %c0_i32_0 = arith.constant 0 : i32
    return %arg0, %c0_i32 : i32, i32
  }
}

</mosaic_0001>

<llo_original>
// kernel: context_network.1
$region0: #{context_network.1}
  #allocation0 [shape = 'u32[]', space=smem, size = 0x4, offset = 0x4, fixed_abs, tag = 'smem constant byte address 0x4 - core index']
  #allocation1 [shape = 'u32[144,128]{1,0:T(1,128)}', space=vmem, size = 0x12000, scoped, tag = 'internal scratch']
  %s0 = inlined_call_operand.hbm [shape: f32[8,32], index: 0, kind: input, shape index: {}]
  %s1 = inlined_call_operand.hbm [shape: f32[32,256], index: 1, kind: input, shape index: {}]
  %s2 = inlined_call_operand.vmem [shape: f32[1,256], index: 2, kind: input, shape index: {}]
  %s3 = inlined_call_operand.hbm [shape: f32[8,128], index: 3, kind: output, shape index: {0}]
  %s4 = inlined_call_operand.hbm [shape: f32[8,128], index: 4, kind: output, shape index: {1}]
  %5 = xla_tuple %s3, %s4
  %s6 = sld [smem:[#allocation0]]
  $region38: #{context_network.1} parent=0
    _
  %s8 = ssub.s32 1, %s6
  %s9 = scalar_select 0, %s8, %s6
  $region1: #{context_network.1} parent=0
    #allocation2 [shape = 'u8[4096]{0}', space=vmem, size = 0x1000, scoped, tag = 'input window, operand 0, single buffered']
    #allocation3 [shape = 's32[1]{0}', space=sflag, size = 0x4, scoped, tag = 'scoped memory for context_network.1']
    #allocation4 [shape = 's32[1]{0}', space=sflag, size = 0x4, scoped, tag = 'scoped memory for context_network.1']
    #allocation5 [shape = 'u8[32768]{0}', space=vmem, size = 0x8000, scoped, tag = 'input window, operand 1, single buffered']
    #allocation6 [shape = 's32[1]{0}', space=sflag, size = 0x4, scoped, tag = 'scoped memory for context_network.1']
    #allocation7 [shape = 'u8[4096]{0}', space=vmem, size = 0x1000, scoped, tag = 'output window, operand 0, single buffered']
    #allocation8 [shape = 'u8[4096]{0}', space=vmem, size = 0x1000, scoped, tag = 'output window, operand 1, single buffered']
    #allocation9 [shape = 's32[1]{0}', space=sflag, size = 0x4, scoped, tag = 'scoped memory for context_network.1']
    %10 = vsyncpa [#allocation3], 0
    %11 = vsyncpa [#allocation6], 0
    %12 = vsyncpa [#allocation4], 0
    %13 = vsyncpa [#allocation9], 0
    // Predicated region
    $region2: #{context_network.1} parent=1 // pred_check
      _
    $region3: #{context_network.1} parent=1 // pred_check_branch
      %15 = sbr.rel (0) target = $region5
    $region4: #{context_network.1} parent=1 // pred_region
      %s17 = ssub.s32 128, 128
      %18 = vsyncadd [#allocation3], %s17
      %s20 = sshll.u32 [#allocation2], 4
      %s21 = int_to_ptr.vmem [resolvable:$true] %s20
      %23 = dma.hbm_to_vmem [thread:$0]  %s0, 128, %s21, [#allocation3]
    $region5: #{context_network.1} parent=1 // pred_fallthru
      _
    // Predicated region
    $region6: #{context_network.1} parent=1 // pred_check
      _
    $region7: #{context_network.1} parent=1 // pred_check_branch
      %25 = sbr.rel (0) target = $region9
    $region8: #{context_network.1} parent=1 // pred_region
      %s27 = ssub.s32 1024, 1024
      %28 = vsyncadd [#allocation6], %s27
      %s29 = sshll.u32 [#allocation5], 4
      %s30 = int_to_ptr.vmem [resolvable:$true] %s29
      %35 = dma.hbm_to_vmem [thread:$0]  %s1, 1024, %s30, [#allocation6], 256, 256, 16
    $region9: #{context_network.1} parent=1 // pred_fallthru
      _
    // Predicated region
    $region10: #{context_network.1} parent=1 // pred_check
      _
    $region11: #{context_network.1} parent=1 // pred_check_branch
      %37 = sbr.rel (0) target = $region13
    $region12: #{context_network.1} parent=1 // pred_region
      _
    $region13: #{context_network.1} parent=1 // pred_fallthru
      _
    // Predicated region
    $region14: #{context_network.1} parent=1 // pred_check
      _
    $region15: #{context_network.1} parent=1 // pred_check_branch
      %39 = sbr.rel (0) target = $region17
    $region16: #{context_network.1} parent=1 // pred_region
      %40 = dma.done [#allocation3], 128
    $region17: #{context_network.1} parent=1 // pred_fallthru
      _
    // Predicated region
    $region18: #{context_network.1} parent=1 // pred_check
      _
    $region19: #{context_network.1} parent=1 // pred_check_branch
      %42 = sbr.rel (0) target = $region21
    $region20: #{context_network.1} parent=1 // pred_region
      %43 = dma.done [#allocation6], 1024
    $region21: #{context_network.1} parent=1 // pred_fallthru
      _
    %v44 = vld [vmem:[#allocation2] sm:$0xff]
    %v45 = vld [vmem:[#allocation5] sm:$0xff]
    %v46 = vld [vmem:[#allocation5 + $0x8] sm:$0xff]
    %v47 = vld [vmem:[#allocation5 + $0x10] sm:$0xff]
    %v48 = vld [vmem:[#allocation5 + $0x18] sm:$0xff]
    %v49 = vld [vmem:[#allocation5 + $0x20] sm:$0xff]
    %v50 = vld [vmem:[#allocation5 + $0x28] sm:$0xff]
    %v51 = vld [vmem:[#allocation5 + $0x30] sm:$0xff]
    %v52 = vld [vmem:[#allocation5 + $0x38] sm:$0xff]
    %v53 = vld [vmem:[%s2] sm:$0x3]
    %v55 = vlaneseq
    %v56 = vshrl.u32 %v55, 7
    %v57 = vsub.s32 0, %v56
    %v58 = vrot.slane %v53, %v57
    %v59 = vlaneseq
    %v60 = vshrl.u32 %v59, 7
    %v61 = vsub.s32 1, %v60
    %v62 = vrot.slane %v53, %v61
    %vm65 = vcmask 261120
    %v67 = vsel %vm65, %v44, 0
    %69 = vmatprep.subr.mxu0 %v46
    %70 = vmatpush1.msra.mxu0 %v45
    %71 = vmatprep.subr.mxu0 %v48
    %72 = vmatpush1.msra.mxu0 %v47
    %73 = vmatprep.subr.mxu0 %v50
    %74 = vmatpush1.msra.mxu0 %v49
    %75 = vmatprep.subr.mxu0 %v52
    %76 = vmatpush1.msra.mxu0 %v51
    %77 = vmatprep.subr.mxu0 0.0
    %78 = vmatpush1.msra.mxu0 0.0
    %79 = vmatprep.subr.mxu0 0.0
    %80 = vmatpush1.msra.mxu0 0.0
    %81 = vmatprep.subr.mxu0 0.0
    %82 = vmatpush1.msra.mxu0 0.0
    %83 = vmatprep.subr.mxu0 0.0
    %84 = vmatpush1.msra.mxu0 0.0
    %85 = vmatprep.subr.mxu0 0.0
    %86 = vmatpush1.msra.mxu0 0.0
    %87 = vmatprep.subr.mxu0 0.0
    %88 = vmatpush1.msra.mxu0 0.0
    %89 = vmatprep.subr.mxu0 0.0
    %90 = vmatpush1.msra.mxu0 0.0
    %91 = vmatprep.subr.mxu0 0.0
    %92 = vmatpush1.msra.mxu0 0.0
    %93 = vmatprep.subr.mxu0 0.0
    %94 = vmatpush1.msra.mxu0 0.0
    %95 = vmatprep.subr.mxu0 0.0
    %96 = vmatpush1.msra.mxu0 0.0
    %97 = vmatprep.subr.mxu0 0.0
    %98 = vmatpush1.msra.mxu0 0.0
    %99 = vmatprep.subr.mxu0 0.0
    %100 = vmatpush1.msra.mxu0 0.0
    %101 = vmatprep.subr.mxu0 0.0
    %102 = vmatpush1.msra.mxu0 0.0
    %103 = vmatprep.subr.mxu0 0.0
    %104 = vmatpush1.msra.mxu0 0.0
    %105 = vmatprep.subr.mxu0 0.0
    %106 = vmatpush1.msra.mxu0 0.0
    %107 = vmatprep.subr.mxu0 0.0
    %108 = vmatpush1.msra.mxu0 0.0
    %109 = vmatprep.subr.mxu0 0.0
    %110 = vmatpush1.msra.mxu0 0.0
    %111 = vmatprep.subr.mxu0 0.0
    %112 = vmatpush1.msra.mxu0 0.0
    %113 = vmatprep.subr.mxu0 0.0
    %114 = vmatpush1.msra.mxu0 0.0
    %115 = vmatprep.subr.mxu0 0.0
    %116 = vmatpush1.msra.mxu0 0.0
    %117 = vmatprep.subr.mxu0 0.0
    %118 = vmatpush1.msra.mxu0 0.0
    %119 = vmatprep.subr.mxu0 0.0
    %120 = vmatpush1.msra.mxu0 0.0
    %121 = vmatprep.subr.mxu0 0.0
    %122 = vmatpush1.msra.mxu0 0.0
    %123 = vmatprep.subr.mxu0 0.0
    %124 = vmatpush1.msra.mxu0 0.0
    %125 = vmatprep.subr.mxu0 0.0
    %126 = vmatpush1.msra.mxu0 0.0
    %127 = vmatprep.subr.mxu0 0.0
    %128 = vmatpush1.msra.mxu0 0.0
    %129 = vmatprep.subr.mxu0 0.0
    %130 = vmatpush1.msra.mxu0 0.0
    %131 = vmatprep.subr.mxu0 0.0
    %132 = vmatpush1.msra.mxu0 0.0
    %133 = vmatprep.mubr.f32.mxu0 0.0
    %134 = vmatmul.mubr.f32.gmra.mrb[0].mxu0 %v67
    %v135 = vpop.f32.mrb[0].mxu0
    %v136 = vadd.f32 %v58, %v135
    %v137 = vpop.f32.mrb[0].mxu0
    %v138 = vadd.f32 %v62, %v137
    %139 = vdwg.mxu0
    %v140 = vmul.f32 %v136, 0.5
    %v141 = vmul.f32 %v138, 0.5
    %v142 = vtanh.pop %v140
    %v143 = vtanh.pop %v141
    %v144 = vmul.f32 %v142, 0.5
    %v145 = vmul.f32 %v143, 0.5
    %v146 = vadd.f32 %v144, 0.5
    %v147 = vadd.f32 %v145, 0.5
    %v148 = vmul.f32 %v136, %v146
    %v149 = vmul.f32 %v138, %v147
    %150 = vst [vmem:[#allocation7] sm:$0xff] %v148
    %151 = vst [vmem:[#allocation8] sm:$0xff] %v149
    // Predicated region
    $region22: #{context_network.1} parent=1 // pred_check
      _
    $region23: #{context_network.1} parent=1 // pred_check_branch
      %153 = sbr.rel (0) target = $region25
    $region24: #{context_network.1} parent=1 // pred_region
      %s155 = ssub.s32 128, 128
      %156 = vsyncadd [#allocation4], %s155
      %s158 = sshll.u32 [#allocation7], 4
      %s159 = int_to_ptr.vmem [resolvable:$true] %s158
      %161 = dma.vmem_to_hbm [thread:$0]  %s159, 128, %s3, [#allocation4]
    $region25: #{context_network.1} parent=1 // pred_fallthru
      _
    // Predicated region
    $region26: #{context_network.1} parent=1 // pred_check
      _
    $region27: #{context_network.1} parent=1 // pred_check_branch
      %163 = sbr.rel (0) target = $region29
    $region28: #{context_network.1} parent=1 // pred_region
      %s165 = ssub.s32 128, 128
      %166 = vsyncadd [#allocation9], %s165
      %s168 = sshll.u32 [#allocation8], 4
      %s169 = int_to_ptr.vmem [resolvable:$true] %s168
      %171 = dma.vmem_to_hbm [thread:$0]  %s169, 128, %s4, [#allocation9]
    $region29: #{context_network.1} parent=1 // pred_fallthru
      _
    // Predicated region
    $region30: #{context_network.1} parent=1 // pred_check
      _
    $region31: #{context_network.1} parent=1 // pred_check_branch
      %173 = sbr.rel (0) target = $region33
    $region32: #{context_network.1} parent=1 // pred_region
      %174 = dma.done [#allocation4], 128
    $region33: #{context_network.1} parent=1 // pred_fallthru
      _
    // Predicated region
    $region34: #{context_network.1} parent=1 // pred_check
      _
    $region35: #{context_network.1} parent=1 // pred_check_branch
      %176 = sbr.rel (0) target = $region37
    $region36: #{context_network.1} parent=1 // pred_region
      %177 = dma.done [#allocation9], 128
    $region37: #{context_network.1} parent=1 // pred_fallthru
      _
    %178 = vsyncpa [#allocation3], 1
    %179 = vsyncpa [#allocation6], 1
    %180 = vsyncpa [#allocation4], 1
    %181 = vsyncpa [#allocation9], 1

</llo_original>
